<compile_context>
chip_gen: v5e
topology: v5e:2x2
jax: 0.10.0
libtpu: 0.0.40
codegen_flags: <defaults>
</compile_context>

<pallas_src>
import math
from functools import reduce

import jax
import jax.numpy as jnp
from jax.experimental import pallas as pl
from jax.experimental.pallas import tpu as pltpu


_SOFT_BLOCK_CAP = 4 << 20  # per-block soft cap; 1-4 MiB already reaches HBM roofline


def _vmem_budget_bytes():
    """~75% of physical VMEM (leaves headroom for compiler scratch/semaphores)."""
    cap = None
    try:
        info = pltpu.get_tpu_info()
        cap = getattr(info, "vmem_capacity_bytes", None)
    except Exception:
        cap = None
    if not cap:
        cap = 64 << 20  # conservative: assume v7x-sized VMEM if query unavailable
    return int(cap) * 3 // 4


def _select_tiles(channels, hw, itemsize, block_cap):
    """Pick (c_tile, hw_tile): dtype-aware sublane-aligned channel tile that divides
    every input's channel count, and a 128-multiple lane tile, both under block_cap.
    Returns None if the aligned path is not possible."""
    sub = max(8, 32 // itemsize)  # packed sublane multiple: f32->8, bf16->16, int8->32
    g = reduce(math.gcd, channels)
    if g % sub != 0:
        return None

    if hw % 128 == 0:
        hw_tile = None
        for cand in range(hw, 0, -128):          # largest 128-multiple divisor of hw
            if hw % cand == 0 and sub * cand * itemsize <= block_cap:
                hw_tile = cand
                break
        if hw_tile is None:
            return None
    else:
        if sub * hw * itemsize > block_cap:      # can't tile the lane axis legally
            return None
        hw_tile = hw                              # full extent (legal for any hw)

    c_tile = sub
    m = g // sub
    for d in range(m, 0, -1):                     # largest multiple of `sub` dividing g
        if m % d == 0 and d * sub * hw_tile * itemsize <= block_cap:
            c_tile = d * sub
            break
    return c_tile, hw_tile


# ----------------------------------------------------------------------------
# Aligned concat: grid = (N, channel-tiles, lane-tiles); whole-block copies with
# a scalar-prefetched schedule.  Inactive inputs keep a FROZEN block index (the
# block they will need at their next activation), so their DMAs are elided.
# ----------------------------------------------------------------------------
def _aligned_concat(flats, channels, c_tile, hw_tile, vmem_budget):
    n, _, hw = flats[0].shape
    dtype = flats[0].dtype
    itemsize = jnp.dtype(dtype).itemsize
    n_in = len(flats)
    c_total = sum(channels)
    ht = hw // hw_tile

    # ---- static per-step schedule -------------------------------------------
    tiles_per = [c // c_tile for c in channels]
    starts, j0 = [], 0
    owner, dst = [], []
    out_off = 0
    for k, tpk in enumerate(tiles_per):
        starts.append(j0)
        owner += [k] * tpk
        dst += list(range(out_off, out_off + tpk))
        out_off += tpk
        j0 += tpk
    T = j0

    # Per-input schedules: channel block to fetch at step j, and a batch offset
    # (1 == "point at the first block of the NEXT batch" once ownership is done,
    # which the pipeline prefetches for free).
    src = [[0] * T for _ in range(n_in)]
    boff = [[0] * T for _ in range(n_in)]
    for k, tpk in enumerate(tiles_per):
        j0_k, j1_k = starts[k], starts[k] + tpk
        for j in range(T):
            if j0_k <= j < j1_k:
                src[k][j] = j - j0_k            # needed block
                boff[k][j] = 0
            elif j < j0_k:
                src[k][j] = 0                   # frozen at first needed block (this batch)
                boff[k][j] = 0
            else:
                src[k][j] = 0                   # frozen at first block of next batch
                boff[k][j] = 1

    owner_a = jnp.asarray(owner, jnp.int32)                                  # (T,)
    dst_a = jnp.asarray(dst, jnp.int32)                                      # (T,)
    src_a = jnp.asarray([v for row in src for v in row], jnp.int32)          # (n_in*T,)
    boff_a = jnp.asarray([v for row in boff for v in row], jnp.int32)        # (n_in*T,)

    def make_in_idx(k):
        def idx(ni, j, hj, owner_ref, dst_ref, src_ref, boff_ref):
            active = owner_ref[j] == k
            b = jnp.minimum(ni + boff_ref[k * T + j], n - 1)
            hb = jnp.where(active, hj, 0)       # freeze lane block too when inactive
            return (b, src_ref[k * T + j], hb)
        return idx

    def out_idx(ni, j, hj, owner_ref, dst_ref, src_ref, boff_ref):
        return (ni, dst_ref[j], hj)

    def kernel(owner_ref, dst_ref, src_ref, boff_ref, *refs):
        in_refs, o_ref = refs[:-1], refs[-1]
        j = pl.program_id(1)
        act = owner_ref[j]
        for k, r in enumerate(in_refs):
            @pl.when(act == k)
            def _copy(r=r):
                o_ref[...] = r[...]             # whole-block, lane-dense, unmasked store

    block_bytes = c_tile * hw_tile * itemsize
    need = 2 * (n_in + 1) * block_bytes         # double-buffered in/out blocks
    vmem_limit = int(min(max(2 * need, 8 << 20), vmem_budget))

    return pl.pallas_call(
        kernel,
        out_shape=jax.ShapeDtypeStruct((n, c_total, hw), dtype),
        grid_spec=pltpu.PrefetchScalarGridSpec(
            num_scalar_prefetch=4,
            grid=(n, T, ht),
            in_specs=[pl.BlockSpec((1, c_tile, hw_tile), make_in_idx(k))
                      for k in range(n_in)],
            out_specs=pl.BlockSpec((1, c_tile, hw_tile), out_idx),
        ),
        compiler_params=pltpu.CompilerParams(
            # Every grid step writes a distinct output block -> all axes parallel
            # (lets v7x megacore shard the tile axis even when N is 1-2).
            dimension_semantics=("parallel", "parallel", "parallel"),
            vmem_limit_bytes=vmem_limit,
        ),
    )(owner_a, dst_a, src_a, boff_a, *flats)


# ----------------------------------------------------------------------------
# Fallback concat for channel counts that can't be tiled to the packed-sublane
# multiple (e.g. C=4 f32): lane-dense.  Inputs are flattened to (N, 1, C_k*H*W)
# and written as contiguous lane slabs, pipelined over the batch axis.
# ----------------------------------------------------------------------------
def _fallback_concat(flats, channels, hw, vmem_budget):
    n = flats[0].shape[0]
    dtype = flats[0].dtype
    itemsize = jnp.dtype(dtype).itemsize
    c_total = sum(channels)
    lane_sizes = [c * hw for c in channels]
    offs, acc = [], 0
    for s in lane_sizes:
        offs.append(acc)
        acc += s
    total_lanes = acc

    slab_bytes = 2 * total_lanes * itemsize     # input slabs + output slab per step
    need = 2 * slab_bytes                       # double buffered
    if need > vmem_budget:
        # Per-batch slabs too big to stage in VMEM: a bare concat is a strided
        # HBM->HBM DMA and XLA already hits the copy roofline for it.
        return jnp.concatenate(flats, axis=1)

    flat2 = [f.reshape(n, 1, s) for f, s in zip(flats, lane_sizes)]

    def kernel(*refs):
        in_refs, o_ref = refs[:-1], refs[-1]
        for r, off, sz in zip(in_refs, offs, lane_sizes):
            o_ref[:, :, pl.ds(off, sz)] = r[...]   # static, lane-dense slab store

    vmem_limit = int(min(max(2 * need, 8 << 20), vmem_budget))
    out = pl.pallas_call(
        kernel,
        out_shape=jax.ShapeDtypeStruct((n, 1, total_lanes), dtype),
        grid=(n,),
        in_specs=[pl.BlockSpec((1, 1, s), lambda ni: (ni, 0, 0)) for s in lane_sizes],
        out_specs=pl.BlockSpec((1, 1, total_lanes), lambda ni: (ni, 0, 0)),
        compiler_params=pltpu.CompilerParams(
            dimension_semantics=("parallel",),
            vmem_limit_bytes=vmem_limit,
        ),
    )(*flat2)
    return out.reshape(n, c_total, hw)


# ----------------------------------------------------------------------------
# Wrappers
# ----------------------------------------------------------------------------
def pallas_concat_channels(tensors):
    """torch.cat(tensors, dim=1) for NCHW tensors via tiled Pallas copy kernels."""
    tensors = list(tensors)
    N, _, H, W = tensors[0].shape
    dtype = tensors[0].dtype
    for t in tensors:
        assert t.ndim == 4 and t.shape[0] == N and t.shape[2] == H and t.shape[3] == W, \
            "concat inputs must match in N, H, W (only channels may differ)"
        assert t.dtype == dtype, "concat inputs must share a dtype"

    hw = H * W
    channels = [int(t.shape[1]) for t in tensors]
    flats = [t.reshape(N, c, hw) for t, c in zip(tensors, channels)]
    itemsize = jnp.dtype(dtype).itemsize
    n_in = len(tensors)

    budget = _vmem_budget_bytes()
    # Pipeline double-buffers every input + the output -> VMEM = 2*(n_in+1)*block.
    block_cap = min(max(budget // (2 * (n_in + 1)), 8 * 128 * itemsize), _SOFT_BLOCK_CAP)

    tiles = _select_tiles(channels, hw, itemsize, block_cap)
    if tiles is not None:
        out = _aligned_concat(flats, channels, tiles[0], tiles[1], budget)
    else:
        out = _fallback_concat(flats, channels, hw, budget)
    return out.reshape(N, sum(channels), H, W)


def resizer_forward(x):
    """JAX/Pallas equivalent of Resizer.forward."""
    if type(x) is tuple:
        if type(x[1]) is int:
            # (tensor, int) -> just the tensor; no kernel, no data movement.
            return x[0]
        return pallas_concat_channels(list(x))
    # Plain tensor -> identity; no kernel, no data movement.
    return x


# ----------------------------------------------------------------------------
# Demo / correctness check
# ----------------------------------------------------------------------------
if __name__ == "__main__":
    key = jax.random.PRNGKey(0)
    k1, k2, k3, k4, k5 = jax.random.split(key, 5)

    # Small NCHW inputs: batch=2, channels=4, spatial=16x16.
    x1 = jax.random.normal(k1, (2, 4, 16, 16), dtype=jnp.float32)
    x2 = jax.random.normal(k2, (2, 4, 16, 16), dtype=jnp.float32)

    # Branch 1: plain tensor -> identity (no kernel launched).
    out_id = resizer_forward(x1)
    jax.block_until_ready(out_id)
    assert out_id.shape == x1.shape and jnp.array_equal(out_id, x1)

    # Branch 2: (tensor, int) -> return tensor (no kernel launched).
    out_int = resizer_forward((x1, 3))
    jax.block_until_ready(out_int)
    assert jnp.array_equal(out_int, x1)

    # Branch 3a: (tensor, tensor) concat with C=4 -> lane-dense fallback path.
    out_cat = resizer_forward((x1, x2))
    jax.block_until_ready(out_cat)
    ref_cat = jnp.concatenate([x1, x2], axis=1)
    assert out_cat.shape == (2, 8, 16, 16)
    assert jnp.array_equal(out_cat, ref_cat)

    # Branch 3b: aligned, heterogeneous channel counts (3 inputs) -> tiled,
    # scalar-prefetch-scheduled path with frozen inactive indices.
    y1 = jax.random.normal(k3, (2, 32, 16, 16), dtype=jnp.float32)
    y2 = jax.random.normal(k4, (2, 16, 16, 16), dtype=jnp.float32)
    y3 = jax.random.normal(k5, (2, 64, 16, 16), dtype=jnp.float32)
    out_cat2 = resizer_forward((y1, y2, y3))
    jax.block_until_ready(out_cat2)
    ref_cat2 = jnp.concatenate([y1, y2, y3], axis=1)
    assert out_cat2.shape == (2, 112, 16, 16)
    assert jnp.array_equal(out_cat2, ref_cat2)

    # Branch 3c: bf16 aligned path (dtype-aware 16-row channel tile).
    z1 = y1.astype(jnp.bfloat16)
    z2 = y2.astype(jnp.bfloat16)
    out_cat3 = resizer_forward((z1, z2))
    jax.block_until_ready(out_cat3)
    ref_cat3 = jnp.concatenate([z1, z2], axis=1)
    assert out_cat3.shape == (2, 48, 16, 16)
    assert jnp.array_equal(out_cat3, ref_cat3)

    print("KERNEL_OK")
</pallas_src>

<mosaic_0001>
module attributes {stable_mosaic.version = 11 : i64} {
  func.func @kernel(%arg0: i32, %arg1: memref<1x1x1024xf32, #tpu.memory_space<vmem>>, %arg2: memref<1x1x1024xf32, #tpu.memory_space<vmem>>, %arg3: memref<1x1x2048xf32, #tpu.memory_space<vmem>>) attributes {dimension_semantics = [#tpu.dimension_semantics<parallel>], iteration_bounds = array<i64: 2>, scalar_prefetch = 0 : i64, scratch_operands = 0 : i64, tpu.core_type = #tpu.core_type<tc>, window_params = [{transform_indices = @transform_0, window_bounds = array<i64: 1, 1, 1024>}, {transform_indices = @transform_1, window_bounds = array<i64: 1, 1, 1024>}, {transform_indices = @transform_2, window_bounds = array<i64: 1, 1, 2048>}]} {
    %c0 = arith.constant 0 : index
    %c0_0 = arith.constant 0 : index
    %c0_1 = arith.constant 0 : index
    %0 = vector.load %arg1[%c0, %c0_0, %c0_1] : memref<1x1x1024xf32, #tpu.memory_space<vmem>>, vector<1x1x1024xf32>
    %c0_2 = arith.constant 0 : index
    %c0_3 = arith.constant 0 : index
    %c0_4 = arith.constant 0 : index
    %1 = vector.load %arg3[%c0_2, %c0_3, %c0_4] : memref<1x1x2048xf32, #tpu.memory_space<vmem>>, vector<1x1x1024xf32>
    tpu.vector_store %arg3[%c0_2, %c0_3, %c0_4], %0 {strides = array<i32>} : memref<1x1x2048xf32, #tpu.memory_space<vmem>>, vector<1x1x1024xf32>,
    %c0_5 = arith.constant 0 : index
    %c0_6 = arith.constant 0 : index
    %c0_7 = arith.constant 0 : index
    %2 = vector.load %arg2[%c0_5, %c0_6, %c0_7] : memref<1x1x1024xf32, #tpu.memory_space<vmem>>, vector<1x1x1024xf32>
    %c0_8 = arith.constant 0 : index
    %c0_9 = arith.constant 0 : index
    %c1024 = arith.constant 1024 : index
    %3 = vector.load %arg3[%c0_8, %c0_9, %c1024] : memref<1x1x2048xf32, #tpu.memory_space<vmem>>, vector<1x1x1024xf32>
    tpu.vector_store %arg3[%c0_8, %c0_9, %c1024], %2 {strides = array<i32>} : memref<1x1x2048xf32, #tpu.memory_space<vmem>>, vector<1x1x1024xf32>,
    return
  }
  func.func @transform_0(%arg0: i32) -> (i32, i32, i32) {
    %c0_i32 = arith.constant 0 : i32
    %c0_i32_0 = arith.constant 0 : i32
    %c0_i32_1 = arith.constant 0 : i32
    return %arg0, %c0_i32, %c0_i32_0 : i32, i32, i32
  }
  func.func @transform_1(%arg0: i32) -> (i32, i32, i32) {
    %c0_i32 = arith.constant 0 : i32
    %c0_i32_0 = arith.constant 0 : i32
    %c0_i32_1 = arith.constant 0 : i32
    return %arg0, %c0_i32, %c0_i32_0 : i32, i32, i32
  }
  func.func @transform_2(%arg0: i32) -> (i32, i32, i32) {
    %c0_i32 = arith.constant 0 : i32
    %c0_i32_0 = arith.constant 0 : i32
    %c0_i32_1 = arith.constant 0 : i32
    return %arg0, %c0_i32, %c0_i32_0 : i32, i32, i32
  }
}

</mosaic_0001>

<llo_original>
// kernel: tpu_custom_call.1
$region0: #{tpu_custom_call.1}
  #allocation0 [shape = 'u32[]', space=smem, size = 0x4, offset = 0x4, fixed_abs, tag = 'smem constant byte address 0x4 - core index']
  #allocation1 [shape = 'u32[72,128]{1,0:T(1,128)}', space=vmem, size = 0x9000, scoped, tag = 'internal scratch']
  %s0 = inlined_call_operand.hbm [shape: f32[2,1,1024], index: 0, kind: input, shape index: {}]
  %s1 = inlined_call_operand.hbm [shape: f32[2,1,1024], index: 1, kind: input, shape index: {}]
  %s2 = inlined_call_operand.hbm [shape: f32[2,1,2048], index: 2, kind: output, shape index: {}]
  %s3 = sld [smem:[#allocation0]]
  $region49: #{tpu_custom_call.1} parent=0
    _
  %s5 = ssub.s32 1, %s3
  %s6 = scalar_select 0, %s5, %s3
  $region1: #{tpu_custom_call.1} parent=0
    #allocation2 [shape = 'u8[8192]{0}', space=vmem, size = 0x2000, scoped, tag = 'input window, operand 0']
    #allocation3 [shape = 's32[2]{0}', space=sflag, size = 0x8, scoped, tag = 'scoped memory for tpu_custom_call.1']
    #allocation4 [shape = 's32[2]{0}', space=sflag, size = 0x8, scoped, tag = 'scoped memory for tpu_custom_call.1']
    #allocation5 [shape = 'u8[8192]{0}', space=vmem, size = 0x2000, scoped, tag = 'input window, operand 1']
    #allocation6 [shape = 's32[2]{0}', space=sflag, size = 0x8, scoped, tag = 'scoped memory for tpu_custom_call.1']
    #allocation7 [shape = 'u8[16384]{0}', space=vmem, size = 0x4000, scoped, tag = 'output window, operand 0']
    %7 = vsyncpa [#allocation3], 0
    %s8 = scalar_lea.sflag [#allocation3], 1
    %9 = vsyncpa %s8, 0
    %10 = vsyncpa [#allocation6], 0
    %s11 = scalar_lea.sflag [#allocation6], 1
    %12 = vsyncpa %s11, 0
    %13 = vsyncpa [#allocation4], 0
    %s14 = scalar_lea.sflag [#allocation4], 1
    %15 = vsyncpa %s14, 0
    loop: start=0, step=1, limit=4
    $region2: #{tpu_custom_call.1} parent=1 // loop_pre_header
      _
    $region3: #{tpu_custom_call.1} parent=1 // loop_header
      %s17 = sphi 0, %s21
      %p18 = scmp.ge.s32.totalorder %s17, 4
      %s27 = sphi 0, %s29
      %s30 = sphi 0, %s27
      %s31 = sphi 0, %s30
      %s47 = sphi 0, %s31
      %s53 = sphi 0, %s55
      %s56 = sphi 0, %s53
      %s57 = sphi 0, %s56
      %s73 = sphi 0, %s57
      %s79 = sphi 0, %s81
      %s82 = sphi 0, %s79
      %s83 = sphi 0, %s82
      %s99 = sphi 0, %s83
    $region4: #{tpu_custom_call.1} parent=1 // loop_header_branch
      %20 = sbr.rel (%p18) target = $region8
    $region5: #{tpu_custom_call.1} parent=1 // loop_body
      %s22 = ssub.s32 %s17, 1
      %s23 = ssub.s32 %s17, 2
      %s24 = sadd.s32 %s17, 1
      %s25 = ssub.s32 %s17, %s24
      %p26 = scmp.eq.s32.totalorder %s25, 0
      %s28 = sadd.s32 %s27, 1
      %s29 = scalar_select %p26, %s27, %s28
      %p32 = pneg %p26
      %p33 = scmp.eq.s32.totalorder %s17, 1
      %p34 = por %p32, %p33
      %p35 = scmp.ne.s32.totalorder %s27, %s30
      %p36 = scmp.eq.s32.totalorder %s17, 0
      %p37 = por %p35, %p36
      %p38 = scmp.ne.s32.totalorder %s27, %s30
      %p39 = scmp.eq.s32.totalorder %s22, 1
      %p40 = por %p38, %p39
      %p41 = scmp.ne.s32.totalorder %s30, %s31
      %p42 = scmp.eq.s32.totalorder %s22, 0
      %p43 = por %p41, %p42
      %p44 = scmp.ne.s32.totalorder %s30, %s31
      %p45 = scmp.eq.s32.totalorder %s23, 1
      %p46 = por %p44, %p45
      %p48 = scmp.ne.s32.totalorder %s31, %s47
      %p49 = scmp.eq.s32.totalorder %s23, 0
      %p50 = por %p48, %p49
      %s51 = ssub.s32 %s17, %s24
      %p52 = scmp.eq.s32.totalorder %s51, 0
      %s54 = sadd.s32 %s53, 1
      %s55 = scalar_select %p52, %s53, %s54
      %p58 = pneg %p52
      %p59 = scmp.eq.s32.totalorder %s17, 1
      %p60 = por %p58, %p59
      %p61 = scmp.ne.s32.totalorder %s53, %s56
      %p62 = scmp.eq.s32.totalorder %s17, 0
      %p63 = por %p61, %p62
      %p64 = scmp.ne.s32.totalorder %s53, %s56
      %p65 = scmp.eq.s32.totalorder %s22, 1
      %p66 = por %p64, %p65
      %p67 = scmp.ne.s32.totalorder %s56, %s57
      %p68 = scmp.eq.s32.totalorder %s22, 0
      %p69 = por %p67, %p68
      %p70 = scmp.ne.s32.totalorder %s56, %s57
      %p71 = scmp.eq.s32.totalorder %s23, 1
      %p72 = por %p70, %p71
      %p74 = scmp.ne.s32.totalorder %s57, %s73
      %p75 = scmp.eq.s32.totalorder %s23, 0
      %p76 = por %p74, %p75
      %s77 = ssub.s32 %s17, %s24
      %p78 = scmp.eq.s32.totalorder %s77, 0
      %s80 = sadd.s32 %s79, 1
      %s81 = scalar_select %p78, %s79, %s80
      %p84 = pneg %p78
      %p85 = scmp.eq.s32.totalorder %s17, 1
      %p86 = por %p84, %p85
      %p87 = scmp.ne.s32.totalorder %s79, %s82
      %p88 = scmp.eq.s32.totalorder %s17, 0
      %p89 = por %p87, %p88
      %p90 = scmp.ne.s32.totalorder %s79, %s82
      %p91 = scmp.eq.s32.totalorder %s22, 1
      %p92 = por %p90, %p91
      %p93 = scmp.ne.s32.totalorder %s82, %s83
      %p94 = scmp.eq.s32.totalorder %s22, 0
      %p95 = por %p93, %p94
      %p96 = scmp.ne.s32.totalorder %s82, %s83
      %p97 = scmp.eq.s32.totalorder %s23, 1
      %p98 = por %p96, %p97
      %p100 = scmp.ne.s32.totalorder %s83, %s99
      %p101 = scmp.eq.s32.totalorder %s23, 0
      %p102 = por %p100, %p101
      %p103 = scmp.le.s32.totalorder 1, %s17
      %p104 = scmp.lt.s32.totalorder %s17, 3
      %p105 = pnand %p103, %p104
      %p106 = pneg %p105
      // Predicated region
      $region9: #{tpu_custom_call.1} parent=5 // pred_check
        _
      $region10: #{tpu_custom_call.1} parent=5 // pred_check_branch
        %108 = sbr.rel (%p105) target = $region12
      $region11: #{tpu_custom_call.1} parent=5 // pred_region
        %s109 = ssub.s32 %s17, 1
      $region12: #{tpu_custom_call.1} parent=5 // pred_fallthru
        _
      %p110 = scmp.lt.s32.totalorder %s17, 2
      // Predicated region
      $region13: #{tpu_custom_call.1} parent=5 // pred_check
        %p111 = pneg %p110
      $region14: #{tpu_custom_call.1} parent=5 // pred_check_branch
        %113 = sbr.rel (%p111) target = $region16
      $region15: #{tpu_custom_call.1} parent=5 // pred_region
        // Predicated region
        $region17: #{tpu_custom_call.1} parent=15 // pred_check
          %p114 = pneg %p37
        $region18: #{tpu_custom_call.1} parent=15 // pred_check_branch
          %116 = sbr.rel (%p114) target = $region20
        $region19: #{tpu_custom_call.1} parent=15 // pred_region
          %s117 = sand.u32 %s27, 1
          %s118 = scalar_lea.sflag [#allocation3], %s117
          %s119 = sand.u32 %s27, 1
          %s120 = smul.addr %s119, 8
          %s121 = scalar_lea.vmem [#allocation2], %s120
          %123 = vsyncadd %s118, 0
          %s124 = smul.addr %s17, 8
          %s125 = scalar_lea.hbm %s0, %s124
          %s127 = sshll.u32 %s125, 4
          %s128 = int_to_ptr.hbm [resolvable:$true] %s127
          %s129 = sshll.u32 %s121, 4
          %s130 = int_to_ptr.vmem [resolvable:$true] %s129
          %132 = dma.hbm_to_vmem [thread:$0]  %s128, 128, %s130, %s118
        $region20: #{tpu_custom_call.1} parent=15 // pred_fallthru
          _
        // Predicated region
        $region21: #{tpu_custom_call.1} parent=15 // pred_check
          %p133 = pneg %p63
        $region22: #{tpu_custom_call.1} parent=15 // pred_check_branch
          %135 = sbr.rel (%p133) target = $region24
        $region23: #{tpu_custom_call.1} parent=15 // pred_region
          %s136 = sand.u32 %s53, 1
          %s137 = scalar_lea.sflag [#allocation6], %s136
          %s138 = sand.u32 %s53, 1
          %s139 = smul.addr %s138, 8
          %s140 = scalar_lea.vmem [#allocation5], %s139
          %142 = vsyncadd %s137, 0
          %s143 = smul.addr %s17, 8
          %s144 = scalar_lea.hbm %s1, %s143
          %s146 = sshll.u32 %s144, 4
          %s147 = int_to_ptr.hbm [resolvable:$true] %s146
          %s148 = sshll.u32 %s140, 4
          %s149 = int_to_ptr.vmem [resolvable:$true] %s148
          %151 = dma.hbm_to_vmem [thread:$0]  %s147, 128, %s149, %s137
        $region24: #{tpu_custom_call.1} parent=15 // pred_fallthru
          _
      $region16: #{tpu_custom_call.1} parent=5 // pred_fallthru
        _
      %p152 = scmp.le.s32.totalorder 1, %s17
      %p153 = scmp.lt.s32.totalorder %s17, 3
      %p154 = pnand %p152, %p153
      %p155 = pneg %p154
      // Predicated region
      $region25: #{tpu_custom_call.1} parent=5 // pred_check
        _
      $region26: #{tpu_custom_call.1} parent=5 // pred_check_branch
        %157 = sbr.rel (%p154) target = $region28
      $region27: #{tpu_custom_call.1} parent=5 // pred_region
        %s158 = ssub.s32 %s17, 1
        %s159 = sand.u32 %s30, 1
        %s160 = scalar_lea.sflag [#allocation3], %s159
        %s161 = sand.u32 %s30, 1
        %s162 = smul.addr %s161, 8
        %s163 = scalar_lea.vmem [#allocation2], %s162
        // Predicated region
        $region29: #{tpu_custom_call.1} parent=27 // pred_check
          %p164 = pneg %p43
        $region30: #{tpu_custom_call.1} parent=27 // pred_check_branch
          %166 = sbr.rel (%p164) target = $region32
        $region31: #{tpu_custom_call.1} parent=27 // pred_region
          %168 = dma.done %s160, 128
        $region32: #{tpu_custom_call.1} parent=27 // pred_fallthru
          _
        %s169 = sand.u32 %s56, 1
        %s170 = scalar_lea.sflag [#allocation6], %s169
        %s171 = sand.u32 %s56, 1
        %s172 = smul.addr %s171, 8
        %s173 = scalar_lea.vmem [#allocation5], %s172
        // Predicated region
        $region33: #{tpu_custom_call.1} parent=27 // pred_check
          %p174 = pneg %p69
        $region34: #{tpu_custom_call.1} parent=27 // pred_check_branch
          %176 = sbr.rel (%p174) target = $region36
        $region35: #{tpu_custom_call.1} parent=27 // pred_region
          %178 = dma.done %s170, 128
        $region36: #{tpu_custom_call.1} parent=27 // pred_fallthru
          _
        %s179 = sand.u32 %s30, 1
        %s180 = scalar_lea.sflag [#allocation3], %s179
        %s181 = sand.u32 %s30, 1
        %s182 = smul.addr %s181, 8
        %s183 = scalar_lea.vmem [#allocation2], %s182
        %p184 = pneg %p43
        %p185 = pneg %p40
        %s186 = sand.u32 %s56, 1
        %s187 = scalar_lea.sflag [#allocation6], %s186
        %s188 = sand.u32 %s56, 1
        %s189 = smul.addr %s188, 8
        %s190 = scalar_lea.vmem [#allocation5], %s189
        %p191 = pneg %p69
        %p192 = pneg %p66
        %p193 = pneg %p95
        %p194 = pneg %p92
        %s195 = sand.u32 %s82, 1
        %s196 = scalar_lea.sflag [#allocation4], %s195
        %s197 = sand.u32 %s82, 1
        %s198 = smul.addr %s197, 16
        %s199 = scalar_lea.vmem [#allocation7], %s198
        %v200 = vld [vmem:[%s163] sm:$0xff]
        %201 = vst [vmem:[%s199] sm:$0xff] %v200
        %v202 = vld [vmem:[%s173] sm:$0xff]
        %203 = vst [vmem:[%s199 + $0x8] sm:$0xff] %v202
        %s204 = sand.u32 %s82, 1
        %s205 = scalar_lea.sflag [#allocation4], %s204
        %s206 = sand.u32 %s82, 1
        %s207 = smul.addr %s206, 16
        %s208 = scalar_lea.vmem [#allocation7], %s207
        // Predicated region
        $region37: #{tpu_custom_call.1} parent=27 // pred_check
          %p209 = pneg %p92
        $region38: #{tpu_custom_call.1} parent=27 // pred_check_branch
          %211 = sbr.rel (%p209) target = $region40
        $region39: #{tpu_custom_call.1} parent=27 // pred_region
          %213 = vsyncadd %s205, 0
          %s214 = smul.addr %s22, 16
          %s215 = scalar_lea.hbm %s2, %s214
          %s217 = sshll.u32 %s208, 4
          %s218 = int_to_ptr.vmem [resolvable:$true] %s217
          %s219 = sshll.u32 %s215, 4
          %s220 = int_to_ptr.hbm [resolvable:$true] %s219
          %222 = dma.vmem_to_hbm [thread:$0]  %s218, 256, %s220, %s205
        $region40: #{tpu_custom_call.1} parent=27 // pred_fallthru
          _
      $region28: #{tpu_custom_call.1} parent=5 // pred_fallthru
        _
      %p223 = scmp.le.s32.totalorder 2, %s17
      // Predicated region
      $region41: #{tpu_custom_call.1} parent=5 // pred_check
        %p224 = pneg %p223
      $region42: #{tpu_custom_call.1} parent=5 // pred_check_branch
        %226 = sbr.rel (%p224) target = $region44
      $region43: #{tpu_custom_call.1} parent=5 // pred_region
        %s227 = ssub.s32 %s17, 2
        // Predicated region
        $region45: #{tpu_custom_call.1} parent=43 // pred_check
          %p228 = pneg %p98
        $region46: #{tpu_custom_call.1} parent=43 // pred_check_branch
          %230 = sbr.rel (%p228) target = $region48
        $region47: #{tpu_custom_call.1} parent=43 // pred_region
          %s231 = sand.u32 %s83, 1
          %s232 = scalar_lea.sflag [#allocation4], %s231
          %s233 = sand.u32 %s83, 1
          %s234 = smul.addr %s233, 16
          %s235 = scalar_lea.vmem [#allocation7], %s234
          %237 = dma.done %s232, 256
        $region48: #{tpu_custom_call.1} parent=43 // pred_fallthru
          _
      $region44: #{tpu_custom_call.1} parent=5 // pred_fallthru
        _
    $region6: #{tpu_custom_call.1} parent=1 // loop_footer
      %s21 = sadd.s32 1, %s17
    $region7: #{tpu_custom_call.1} parent=1 // loop_footer_branch
      %16 = sbr.rel target = $region3
    $region8: #{tpu_custom_call.1} parent=1 // loop_exit
      _
    %238 = vsyncpa [#allocation3], 1
    %s239 = scalar_lea.sflag [#allocation3], 1
    %240 = vsyncpa %s239, 1
    %241 = vsyncpa [#allocation6], 1
    %s242 = scalar_lea.sflag [#allocation6], 1
    %243 = vsyncpa %s242, 1
    %244 = vsyncpa [#allocation4], 1
    %s245 = scalar_lea.sflag [#allocation4], 1
    %246 = vsyncpa %s245, 1

</llo_original>
